<compile_context>
chip_gen: v6e
topology: v6e:2x2x1
jax: 0.10.0
libtpu: 0.0.40
codegen_flags: <defaults>
</compile_context>

<pallas_src>
import jax
import jax.numpy as jnp
from jax.experimental import pallas as pl
from jax.experimental.pallas import tpu as pltpu


def mlp_kernel(x_ref, w1_ref, b1_ref, w2_ref, b2_ref, w3_ref, b3_ref, o_ref):
    # fc1 + relu (bf16 operands, f32 accumulate)
    x = x_ref[...].astype(jnp.bfloat16)
    h1 = jnp.dot(x, w1_ref[...], preferred_element_type=jnp.float32)
    h1 = jnp.maximum(h1 + b1_ref[...], 0.0)
    # fc2 + relu
    h2 = jnp.dot(h1.astype(jnp.bfloat16), w2_ref[...],
                 preferred_element_type=jnp.float32)
    h2 = jnp.maximum(h2 + b2_ref[...], 0.0)
    # fc3 (padded to 128 output lanes) + sigmoid; full-lane unmasked store.
    logits = jnp.dot(h2.astype(jnp.bfloat16), w3_ref[...],
                     preferred_element_type=jnp.float32)
    o_ref[...] = jax.nn.sigmoid(logits + b3_ref[...])


def _round_up(n, m):
    return (n + m - 1) // m * m


def net_forward(x, params, *, block_b=256, out_pad=128):
    """Forward pass of Net. x: [B, D] f32. Returns [B, 2] f32."""
    w1, b1, w2, b2, w3, b3 = params
    B, D = x.shape
    out_dim = w3.shape[1]

    # Lane-dense output: zero-pad the last layer to 128 output lanes so the
    # kernel store is an unmasked full-lane vst. Padded columns produce
    # sigmoid(0)=0.5 and are sliced off below.
    w3p = jnp.zeros((w3.shape[0], out_pad), w3.dtype).at[:, :out_dim].set(w3)
    b3p = jnp.zeros((1, out_pad), b3.dtype).at[:, :out_dim].set(b3)

    # bf16 matmul operands (v6e/v7x MXU-native); biases stay f32.
    w1b = w1.astype(jnp.bfloat16)
    w2b = w2.astype(jnp.bfloat16)
    w3b = w3p.astype(jnp.bfloat16)

    # Batch tile: large enough to fill MXU rows / amortize per-step overhead,
    # small enough to fit double-buffered under v7x's 64 MiB VMEM (tiny here).
    tb = min(block_b, _round_up(B, 8))
    B_pad = _round_up(B, tb)
    if B_pad != B:
        x = jnp.pad(x, ((0, B_pad - B), (0, 0)))
    grid = (B_pad // tb,)

    # x/out are tiled over the batch grid; weights/biases are full-array
    # blocks (same index every step) so they stay VMEM-resident.
    x_spec = pl.BlockSpec((tb, D), lambda i: (i, 0))
    out_spec = pl.BlockSpec((tb, out_pad), lambda i: (i, 0))

    def resident(a):
        return pl.BlockSpec(a.shape, lambda i: (0, 0))

    out = pl.pallas_call(
        mlp_kernel,
        out_shape=jax.ShapeDtypeStruct((B_pad, out_pad), jnp.float32),
        grid=grid,
        in_specs=[x_spec,
                  resident(w1b), resident(b1),
                  resident(w2b), resident(b2),
                  resident(w3b), resident(b3p)],
        out_specs=out_spec,
        compiler_params=pltpu.CompilerParams(
            dimension_semantics=("parallel",),      # 2-TC split on v7x
            vmem_limit_bytes=32 * 1024 * 1024,      # explicit; safe on v5e/v6e/v7x
        ),
    )(x, w1b, b1, w2b, b2, w3b, b3p)

    return out[:B, :out_dim]


def init_params(key, input_shape):
    # Deterministic synthetic init (PyTorch-like uniform(-1/sqrt(fan_in), 1/sqrt(fan_in)))
    def linear(key, fan_in, fan_out):
        k_w, k_b = jax.random.split(key)
        bound = 1.0 / jnp.sqrt(fan_in)
        w = jax.random.uniform(k_w, (fan_in, fan_out), jnp.float32, -bound, bound)
        b = jax.random.uniform(k_b, (1, fan_out), jnp.float32, -bound, bound)
        return w, b

    k1, k2, k3 = jax.random.split(key, 3)
    w1, b1 = linear(k1, input_shape, 32)
    w2, b2 = linear(k2, 32, 64)
    w3, b3 = linear(k3, 64, 2)
    return (w1, b1, w2, b2, w3, b3)


if __name__ == "__main__":
    key = jax.random.PRNGKey(0)
    k_x, k_p = jax.random.split(key)

    # B not a multiple of the batch tile -> exercises the pad-and-slice path
    # and a multi-step (pipelined) grid.
    B, D = 300, 16
    x = jax.random.normal(k_x, (B, D), dtype=jnp.float32)
    params = init_params(k_p, D)

    out = net_forward(x, params)
    out = jax.block_until_ready(out)

    # Reference check in plain f32 JAX (kernel uses bf16 matmul operands, so
    # allow a modest tolerance).
    w1, b1, w2, b2, w3, b3 = params
    h = jnp.maximum(x @ w1 + b1, 0.0)
    h = jnp.maximum(h @ w2 + b2, 0.0)
    ref = jax.nn.sigmoid(h @ w3 + b3)

    assert out.shape == (B, 2), out.shape
    assert jnp.allclose(out, ref, atol=2e-2), "mismatch vs reference"

    print("KERNEL_OK")
</pallas_src>

<mosaic_0001>
module attributes {stable_mosaic.version = 11 : i64} {
  func.func @mlp_kernel(%arg0: i32, %arg1: memref<256x16xf32, #tpu.memory_space<vmem>>, %arg2: memref<16x32xbf16, #tpu.memory_space<vmem>>, %arg3: memref<1x32xf32, #tpu.memory_space<vmem>>, %arg4: memref<32x64xbf16, #tpu.memory_space<vmem>>, %arg5: memref<1x64xf32, #tpu.memory_space<vmem>>, %arg6: memref<64x128xbf16, #tpu.memory_space<vmem>>, %arg7: memref<1x128xf32, #tpu.memory_space<vmem>>, %arg8: memref<256x128xf32, #tpu.memory_space<vmem>>) attributes {dimension_semantics = [#tpu.dimension_semantics<parallel>], iteration_bounds = array<i64: 2>, scalar_prefetch = 0 : i64, scratch_operands = 0 : i64, tpu.core_type = #tpu.core_type<tc>, window_params = [{transform_indices = @transform_0, window_bounds = array<i64: 256, 16>}, {pipeline_mode = #tpu.pipeline_mode<synchronous>, transform_indices = @transform_1, window_bounds = array<i64: 16, 32>}, {pipeline_mode = #tpu.pipeline_mode<synchronous>, transform_indices = @transform_2, window_bounds = array<i64: 1, 32>}, {pipeline_mode = #tpu.pipeline_mode<synchronous>, transform_indices = @transform_3, window_bounds = array<i64: 32, 64>}, {pipeline_mode = #tpu.pipeline_mode<synchronous>, transform_indices = @transform_4, window_bounds = array<i64: 1, 64>}, {pipeline_mode = #tpu.pipeline_mode<synchronous>, transform_indices = @transform_5, window_bounds = array<i64: 64, 128>}, {pipeline_mode = #tpu.pipeline_mode<synchronous>, transform_indices = @transform_6, window_bounds = array<i64: 1, 128>}, {transform_indices = @transform_7, window_bounds = array<i64: 256, 128>}]} {
    %c0 = arith.constant 0 : index
    %c0_0 = arith.constant 0 : index
    %0 = vector.load %arg1[%c0, %c0_0] : memref<256x16xf32, #tpu.memory_space<vmem>>, vector<256x16xf32>
    %1 = arith.truncf %0 : vector<256x16xf32> to vector<256x16xbf16>
    %c0_1 = arith.constant 0 : index
    %c0_2 = arith.constant 0 : index
    %2 = vector.load %arg2[%c0_1, %c0_2] : memref<16x32xbf16, #tpu.memory_space<vmem>>, vector<16x32xbf16>
    %cst = arith.constant dense<0.000000e+00> : vector<256x32xf32>
    %3 = tpu.matmul %1, %2, %cst {dimension_numbers = #tpu.dot_dimension_numbers<[1], [0], [0], [1], [0, 0, 1, 1], [], []>} : vector<256x16xbf16>, vector<16x32xbf16>, vector<256x32xf32> -> vector<256x32xf32>
    %c0_3 = arith.constant 0 : index
    %c0_4 = arith.constant 0 : index
    %4 = vector.load %arg3[%c0_3, %c0_4] : memref<1x32xf32, #tpu.memory_space<vmem>>, vector<1x32xf32>
    %5 = vector.broadcast %4 : vector<1x32xf32> to vector<256x32xf32>
    %6 = arith.addf %3, %5 : vector<256x32xf32>
    %cst_5 = arith.constant 0.000000e+00 : f32
    %7 = vector.broadcast %cst_5 : f32 to vector<256x32xf32>
    %8 = arith.maximumf %6, %7 : vector<256x32xf32>
    %9 = arith.truncf %8 : vector<256x32xf32> to vector<256x32xbf16>
    %c0_6 = arith.constant 0 : index
    %c0_7 = arith.constant 0 : index
    %10 = vector.load %arg4[%c0_6, %c0_7] : memref<32x64xbf16, #tpu.memory_space<vmem>>, vector<32x64xbf16>
    %cst_8 = arith.constant dense<0.000000e+00> : vector<256x64xf32>
    %11 = tpu.matmul %9, %10, %cst_8 {dimension_numbers = #tpu.dot_dimension_numbers<[1], [0], [0], [1], [0, 0, 1, 1], [], []>} : vector<256x32xbf16>, vector<32x64xbf16>, vector<256x64xf32> -> vector<256x64xf32>
    %c0_9 = arith.constant 0 : index
    %c0_10 = arith.constant 0 : index
    %12 = vector.load %arg5[%c0_9, %c0_10] : memref<1x64xf32, #tpu.memory_space<vmem>>, vector<1x64xf32>
    %13 = vector.broadcast %12 : vector<1x64xf32> to vector<256x64xf32>
    %14 = arith.addf %11, %13 : vector<256x64xf32>
    %cst_11 = arith.constant 0.000000e+00 : f32
    %15 = vector.broadcast %cst_11 : f32 to vector<256x64xf32>
    %16 = arith.maximumf %14, %15 : vector<256x64xf32>
    %17 = arith.truncf %16 : vector<256x64xf32> to vector<256x64xbf16>
    %c0_12 = arith.constant 0 : index
    %c0_13 = arith.constant 0 : index
    %18 = vector.load %arg6[%c0_12, %c0_13] : memref<64x128xbf16, #tpu.memory_space<vmem>>, vector<64x128xbf16>
    %cst_14 = arith.constant dense<0.000000e+00> : vector<256x128xf32>
    %19 = tpu.matmul %17, %18, %cst_14 {dimension_numbers = #tpu.dot_dimension_numbers<[1], [0], [0], [1], [0, 0, 1, 1], [], []>} : vector<256x64xbf16>, vector<64x128xbf16>, vector<256x128xf32> -> vector<256x128xf32>
    %c0_15 = arith.constant 0 : index
    %c0_16 = arith.constant 0 : index
    %20 = vector.load %arg7[%c0_15, %c0_16] : memref<1x128xf32, #tpu.memory_space<vmem>>, vector<1x128xf32>
    %21 = vector.broadcast %20 : vector<1x128xf32> to vector<256x128xf32>
    %22 = arith.addf %19, %21 : vector<256x128xf32>
    %23 = arith.negf %22 : vector<256x128xf32>
    %24 = math.exp %23 : vector<256x128xf32>
    %cst_17 = arith.constant 1.000000e+00 : f32
    %25 = vector.broadcast %cst_17 : f32 to vector<256x128xf32>
    %26 = arith.addf %25, %24 : vector<256x128xf32>
    %27 = arith.divf %25, %26 : vector<256x128xf32>
    %c0_18 = arith.constant 0 : index
    %c0_19 = arith.constant 0 : index
    %28 = vector.load %arg8[%c0_18, %c0_19] : memref<256x128xf32, #tpu.memory_space<vmem>>, vector<256x128xf32>
    tpu.vector_store %arg8[%c0_18, %c0_19], %27 {strides = array<i32>} : memref<256x128xf32, #tpu.memory_space<vmem>>, vector<256x128xf32>,
    return
  }
  func.func @transform_0(%arg0: i32) -> (i32, i32) {
    %c0_i32 = arith.constant 0 : i32
    %c0_i32_0 = arith.constant 0 : i32
    return %arg0, %c0_i32 : i32, i32
  }
  func.func @transform_1(%arg0: i32) -> (i32, i32) {
    %c0_i32 = arith.constant 0 : i32
    %c0_i32_0 = arith.constant 0 : i32
    %c0_i32_1 = arith.constant 0 : i32
    return %c0_i32, %c0_i32_0 : i32, i32
  }
  func.func @transform_2(%arg0: i32) -> (i32, i32) {
    %c0_i32 = arith.constant 0 : i32
    %c0_i32_0 = arith.constant 0 : i32
    %c0_i32_1 = arith.constant 0 : i32
    return %c0_i32, %c0_i32_0 : i32, i32
  }
  func.func @transform_3(%arg0: i32) -> (i32, i32) {
    %c0_i32 = arith.constant 0 : i32
    %c0_i32_0 = arith.constant 0 : i32
    %c0_i32_1 = arith.constant 0 : i32
    return %c0_i32, %c0_i32_0 : i32, i32
  }
  func.func @transform_4(%arg0: i32) -> (i32, i32) {
    %c0_i32 = arith.constant 0 : i32
    %c0_i32_0 = arith.constant 0 : i32
    %c0_i32_1 = arith.constant 0 : i32
    return %c0_i32, %c0_i32_0 : i32, i32
  }
  func.func @transform_5(%arg0: i32) -> (i32, i32) {
    %c0_i32 = arith.constant 0 : i32
    %c0_i32_0 = arith.constant 0 : i32
    %c0_i32_1 = arith.constant 0 : i32
    return %c0_i32, %c0_i32_0 : i32, i32
  }
  func.func @transform_6(%arg0: i32) -> (i32, i32) {
    %c0_i32 = arith.constant 0 : i32
    %c0_i32_0 = arith.constant 0 : i32
    %c0_i32_1 = arith.constant 0 : i32
    return %c0_i32, %c0_i32_0 : i32, i32
  }
  func.func @transform_7(%arg0: i32) -> (i32, i32) {
    %c0_i32 = arith.constant 0 : i32
    %c0_i32_0 = arith.constant 0 : i32
    return %arg0, %c0_i32 : i32, i32
  }
}

</mosaic_0001>

<llo_original>
// kernel: tpu_custom_call.1
$region0: #{tpu_custom_call.1}
  #allocation0 [shape = 'u32[]', space=smem, size = 0x4, offset = 0x4, fixed_abs, tag = 'smem constant byte address 0x4 - core index']
  #allocation1 [shape = 'u32[144,128]{1,0:T(1,128)}', space=vmem, size = 0x12000, scoped, tag = 'internal scratch']
  %s0 = inlined_call_operand.vmem [shape: f32[512,16], index: 0, kind: input, shape index: {}]
  %s1 = inlined_call_operand.vmem [shape: bf16[16,32], index: 1, kind: input, shape index: {}]
  %s2 = inlined_call_operand.vmem [shape: f32[1,32], index: 2, kind: input, shape index: {}]
  %s3 = inlined_call_operand.vmem [shape: bf16[32,64], index: 3, kind: input, shape index: {}]
  %s4 = inlined_call_operand.vmem [shape: f32[1,64], index: 4, kind: input, shape index: {}]
  %s5 = inlined_call_operand.vmem [shape: bf16[64,128], index: 5, kind: input, shape index: {}]
  %s6 = inlined_call_operand.vmem [shape: f32[1,128], index: 6, kind: input, shape index: {}]
  %s7 = inlined_call_operand.hbm [shape: f32[512,128], index: 7, kind: output, shape index: {}]
  %s8 = sld [smem:[#allocation0]]
  $region61: #{tpu_custom_call.1} parent=0
    _
  %s10 = ssub.s32 1, %s8
  %s11 = scalar_select 0, %s10, %s8
  $region1: #{tpu_custom_call.1} parent=0
    #allocation2 [shape = 'u8[262144]{0}', space=vmem, size = 0x40000, scoped, tag = 'output window, operand 0']
    #allocation3 [shape = 's32[2]{0}', space=sflag, size = 0x8, scoped, tag = 'scoped memory for tpu_custom_call.1']
    %12 = vsyncpa [#allocation3], 0
    %s13 = scalar_lea.sflag [#allocation3], 1
    %14 = vsyncpa %s13, 0
    loop: start=0, step=1, limit=4
    $region2: #{tpu_custom_call.1} parent=1 // loop_pre_header
      _
    $region3: #{tpu_custom_call.1} parent=1 // loop_header
      %s16 = sphi 0, %s20
      %p17 = scmp.ge.s32.totalorder %s16, 4
      %s26 = sphi 0, %s28
      %s29 = sphi 0, %s26
      %s30 = sphi 0, %s29
      %s46 = sphi 0, %s30
      %s50 = sphi 0, %s50
      %s52 = sphi 0, %s50
      %s53 = sphi 0, %s52
      %s67 = sphi 0, %s53
      %s71 = sphi 0, %s71
      %s73 = sphi 0, %s71
      %s74 = sphi 0, %s73
      %s88 = sphi 0, %s74
      %s92 = sphi 0, %s92
      %s94 = sphi 0, %s92
      %s95 = sphi 0, %s94
      %s109 = sphi 0, %s95
      %s113 = sphi 0, %s113
      %s115 = sphi 0, %s113
      %s116 = sphi 0, %s115
      %s130 = sphi 0, %s116
      %s134 = sphi 0, %s134
      %s136 = sphi 0, %s134
      %s137 = sphi 0, %s136
      %s151 = sphi 0, %s137
      %s155 = sphi 0, %s155
      %s157 = sphi 0, %s155
      %s158 = sphi 0, %s157
      %s172 = sphi 0, %s158
      %s178 = sphi 0, %s180
      %s181 = sphi 0, %s178
      %s182 = sphi 0, %s181
      %s198 = sphi 0, %s182
    $region4: #{tpu_custom_call.1} parent=1 // loop_header_branch
      %19 = sbr.rel (%p17) target = $region8
    $region5: #{tpu_custom_call.1} parent=1 // loop_body
      %s21 = ssub.s32 %s16, 1
      %s22 = ssub.s32 %s16, 2
      %s23 = sadd.s32 %s16, 1
      %s24 = ssub.s32 %s16, %s23
      %p25 = scmp.eq.s32.totalorder %s24, 0
      %s27 = sadd.s32 %s26, 1
      %s28 = scalar_select %p25, %s26, %s27
      %p31 = pneg %p25
      %p32 = scmp.eq.s32.totalorder %s16, 1
      %p33 = por %p31, %p32
      %p34 = scmp.ne.s32.totalorder %s26, %s29
      %p35 = scmp.eq.s32.totalorder %s16, 0
      %p36 = por %p34, %p35
      %p37 = scmp.ne.s32.totalorder %s26, %s29
      %p38 = scmp.eq.s32.totalorder %s21, 1
      %p39 = por %p37, %p38
      %p40 = scmp.ne.s32.totalorder %s29, %s30
      %p41 = scmp.eq.s32.totalorder %s21, 0
      %p42 = por %p40, %p41
      %p43 = scmp.ne.s32.totalorder %s29, %s30
      %p44 = scmp.eq.s32.totalorder %s22, 1
      %p45 = por %p43, %p44
      %p47 = scmp.ne.s32.totalorder %s30, %s46
      %p48 = scmp.eq.s32.totalorder %s22, 0
      %p49 = por %p47, %p48
      %s51 = sadd.s32 %s50, 1
      %p54 = scmp.eq.s32.totalorder %s16, 1
      %p55 = scmp.ne.s32.totalorder %s50, %s52
      %p56 = scmp.eq.s32.totalorder %s16, 0
      %p57 = por %p55, %p56
      %p58 = scmp.ne.s32.totalorder %s50, %s52
      %p59 = scmp.eq.s32.totalorder %s21, 1
      %p60 = por %p58, %p59
      %p61 = scmp.ne.s32.totalorder %s52, %s53
      %p62 = scmp.eq.s32.totalorder %s21, 0
      %p63 = por %p61, %p62
      %p64 = scmp.ne.s32.totalorder %s52, %s53
      %p65 = scmp.eq.s32.totalorder %s22, 1
      %p66 = por %p64, %p65
      %p68 = scmp.ne.s32.totalorder %s53, %s67
      %p69 = scmp.eq.s32.totalorder %s22, 0
      %p70 = por %p68, %p69
      %s72 = sadd.s32 %s71, 1
      %p75 = scmp.eq.s32.totalorder %s16, 1
      %p76 = scmp.ne.s32.totalorder %s71, %s73
      %p77 = scmp.eq.s32.totalorder %s16, 0
      %p78 = por %p76, %p77
      %p79 = scmp.ne.s32.totalorder %s71, %s73
      %p80 = scmp.eq.s32.totalorder %s21, 1
      %p81 = por %p79, %p80
      %p82 = scmp.ne.s32.totalorder %s73, %s74
      %p83 = scmp.eq.s32.totalorder %s21, 0
      %p84 = por %p82, %p83
      %p85 = scmp.ne.s32.totalorder %s73, %s74
      %p86 = scmp.eq.s32.totalorder %s22, 1
      %p87 = por %p85, %p86
      %p89 = scmp.ne.s32.totalorder %s74, %s88
      %p90 = scmp.eq.s32.totalorder %s22, 0
      %p91 = por %p89, %p90
      %s93 = sadd.s32 %s92, 1
      %p96 = scmp.eq.s32.totalorder %s16, 1
      %p97 = scmp.ne.s32.totalorder %s92, %s94
      %p98 = scmp.eq.s32.totalorder %s16, 0
      %p99 = por %p97, %p98
      %p100 = scmp.ne.s32.totalorder %s92, %s94
      %p101 = scmp.eq.s32.totalorder %s21, 1
      %p102 = por %p100, %p101
      %p103 = scmp.ne.s32.totalorder %s94, %s95
      %p104 = scmp.eq.s32.totalorder %s21, 0
      %p105 = por %p103, %p104
      %p106 = scmp.ne.s32.totalorder %s94, %s95
      %p107 = scmp.eq.s32.totalorder %s22, 1
      %p108 = por %p106, %p107
      %p110 = scmp.ne.s32.totalorder %s95, %s109
      %p111 = scmp.eq.s32.totalorder %s22, 0
      %p112 = por %p110, %p111
      %s114 = sadd.s32 %s113, 1
      %p117 = scmp.eq.s32.totalorder %s16, 1
      %p118 = scmp.ne.s32.totalorder %s113, %s115
      %p119 = scmp.eq.s32.totalorder %s16, 0
      %p120 = por %p118, %p119
      %p121 = scmp.ne.s32.totalorder %s113, %s115
      %p122 = scmp.eq.s32.totalorder %s21, 1
      %p123 = por %p121, %p122
      %p124 = scmp.ne.s32.totalorder %s115, %s116
      %p125 = scmp.eq.s32.totalorder %s21, 0
      %p126 = por %p124, %p125
      %p127 = scmp.ne.s32.totalorder %s115, %s116
      %p128 = scmp.eq.s32.totalorder %s22, 1
      %p129 = por %p127, %p128
      %p131 = scmp.ne.s32.totalorder %s116, %s130
      %p132 = scmp.eq.s32.totalorder %s22, 0
      %p133 = por %p131, %p132
      %s135 = sadd.s32 %s134, 1
      %p138 = scmp.eq.s32.totalorder %s16, 1
      %p139 = scmp.ne.s32.totalorder %s134, %s136
      %p140 = scmp.eq.s32.totalorder %s16, 0
      %p141 = por %p139, %p140
      %p142 = scmp.ne.s32.totalorder %s134, %s136
      %p143 = scmp.eq.s32.totalorder %s21, 1
      %p144 = por %p142, %p143
      %p145 = scmp.ne.s32.totalorder %s136, %s137
      %p146 = scmp.eq.s32.totalorder %s21, 0
      %p147 = por %p145, %p146
      %p148 = scmp.ne.s32.totalorder %s136, %s137
      %p149 = scmp.eq.s32.totalorder %s22, 1
      %p150 = por %p148, %p149
      %p152 = scmp.ne.s32.totalorder %s137, %s151
      %p153 = scmp.eq.s32.totalorder %s22, 0
      %p154 = por %p152, %p153
      %s156 = sadd.s32 %s155, 1
      %p159 = scmp.eq.s32.totalorder %s16, 1
      %p160 = scmp.ne.s32.totalorder %s155, %s157
      %p161 = scmp.eq.s32.totalorder %s16, 0
      %p162 = por %p160, %p161
      %p163 = scmp.ne.s32.totalorder %s155, %s157
      %p164 = scmp.eq.s32.totalorder %s21, 1
      %p165 = por %p163, %p164
      %p166 = scmp.ne.s32.totalorder %s157, %s158
      %p167 = scmp.eq.s32.totalorder %s21, 0
      %p168 = por %p166, %p167
      %p169 = scmp.ne.s32.totalorder %s157, %s158
      %p170 = scmp.eq.s32.totalorder %s22, 1
      %p171 = por %p169, %p170
      %p173 = scmp.ne.s32.totalorder %s158, %s172
      %p174 = scmp.eq.s32.totalorder %s22, 0
      %p175 = por %p173, %p174
      %s176 = ssub.s32 %s16, %s23
      %p177 = scmp.eq.s32.totalorder %s176, 0
      %s179 = sadd.s32 %s178, 1
      %s180 = scalar_select %p177, %s178, %s179
      %p183 = pneg %p177
      %p184 = scmp.eq.s32.totalorder %s16, 1
      %p185 = por %p183, %p184
      %p186 = scmp.ne.s32.totalorder %s178, %s181
      %p187 = scmp.eq.s32.totalorder %s16, 0
      %p188 = por %p186, %p187
      %p189 = scmp.ne.s32.totalorder %s178, %s181
      %p190 = scmp.eq.s32.totalorder %s21, 1
      %p191 = por %p189, %p190
      %p192 = scmp.ne.s32.totalorder %s181, %s182
      %p193 = scmp.eq.s32.totalorder %s21, 0
      %p194 = por %p192, %p193
      %p195 = scmp.ne.s32.totalorder %s181, %s182
      %p196 = scmp.eq.s32.totalorder %s22, 1
      %p197 = por %p195, %p196
      %p199 = scmp.ne.s32.totalorder %s182, %s198
      %p200 = scmp.eq.s32.totalorder %s22, 0
      %p201 = por %p199, %p200
      %p202 = scmp.le.s32.totalorder 1, %s16
      %p203 = scmp.lt.s32.totalorder %s16, 3
      %p204 = pnand %p202, %p203
      %p205 = pneg %p204
      // Predicated region
      $region9: #{tpu_custom_call.1} parent=5 // pred_check
        _
      $region10: #{tpu_custom_call.1} parent=5 // pred_check_branch
        %207 = sbr.rel (%p204) target = $region12
      $region11: #{tpu_custom_call.1} parent=5 // pred_region
        %s208 = ssub.s32 %s16, 1
        // Predicated region
        $region13: #{tpu_custom_call.1} parent=11 // pred_check
          %p209 = pneg %p63
        $region14: #{tpu_custom_call.1} parent=11 // pred_check_branch
          %211 = sbr.rel (%p209) target = $region16
        $region15: #{tpu_custom_call.1} parent=11 // pred_region
          _
        $region16: #{tpu_custom_call.1} parent=11 // pred_fallthru
          _
        // Predicated region
        $region17: #{tpu_custom_call.1} parent=11 // pred_check
          %p212 = pneg %p84
        $region18: #{tpu_custom_call.1} parent=11 // pred_check_branch
          %214 = sbr.rel (%p212) target = $region20
        $region19: #{tpu_custom_call.1} parent=11 // pred_region
          _
        $region20: #{tpu_custom_call.1} parent=11 // pred_fallthru
          _
        // Predicated region
        $region21: #{tpu_custom_call.1} parent=11 // pred_check
          %p215 = pneg %p105
        $region22: #{tpu_custom_call.1} parent=11 // pred_check_branch
          %217 = sbr.rel (%p215) target = $region24
        $region23: #{tpu_custom_call.1} parent=11 // pred_region
          _
        $region24: #{tpu_custom_call.1} parent=11 // pred_fallthru
          _
        // Predicated region
        $region25: #{tpu_custom_call.1} parent=11 // pred_check
          %p218 = pneg %p126
        $region26: #{tpu_custom_call.1} parent=11 // pred_check_branch
          %220 = sbr.rel (%p218) target = $region28
        $region27: #{tpu_custom_call.1} parent=11 // pred_region
          _
        $region28: #{tpu_custom_call.1} parent=11 // pred_fallthru
          _
        // Predicated region
        $region29: #{tpu_custom_call.1} parent=11 // pred_check
          %p221 = pneg %p147
        $region30: #{tpu_custom_call.1} parent=11 // pred_check_branch
          %223 = sbr.rel (%p221) target = $region32
        $region31: #{tpu_custom_call.1} parent=11 // pred_region
          _
        $region32: #{tpu_custom_call.1} parent=11 // pred_fallthru
          _
        // Predicated region
        $region33: #{tpu_custom_call.1} parent=11 // pred_check
          %p224 = pneg %p168
        $region34: #{tpu_custom_call.1} parent=11 // pred_check_branch
          %226 = sbr.rel (%p224) target = $region36
        $region35: #{tpu_custom_call.1} parent=11 // pred_region
          _
        $region36: #{tpu_custom_call.1} parent=11 // pred_fallthru
          _
      $region12: #{tpu_custom_call.1} parent=5 // pred_fallthru
        _
      %p227 = scmp.lt.s32.totalorder %s16, 2
      // Predicated region
      $region37: #{tpu_custom_call.1} parent=5 // pred_check
        %p228 = pneg %p227
      $region38: #{tpu_custom_call.1} parent=5 // pred_check_branch
        %230 = sbr.rel (%p228) target = $region40
      $region39: #{tpu_custom_call.1} parent=5 // pred_region
        // Predicated region
        $region41: #{tpu_custom_call.1} parent=39 // pred_check
          %p231 = pneg %p36
        $region42: #{tpu_custom_call.1} parent=39 // pred_check_branch
          %233 = sbr.rel (%p231) target = $region44
        $region43: #{tpu_custom_call.1} parent=39 // pred_region
          %s234 = smul.u32 32, %s16
          %p235 = scmp.lt.s32.totalorder %s234, 63
          %s236 = scalar_select %p235, %s234, 63
          %s237 = smul.addr %s236, 8
          %s238 = scalar_lea.vmem %s0, %s237
          %s239 = smul.u32 32, %s16
        $region44: #{tpu_custom_call.1} parent=39 // pred_fallthru
          _
      $region40: #{tpu_custom_call.1} parent=5 // pred_fallthru
        _
      %p240 = scmp.le.s32.totalorder 1, %s16
      %p241 = scmp.lt.s32.totalorder %s16, 3
      %p242 = pnand %p240, %p241
      %p243 = pneg %p242
      // Predicated region
      $region45: #{tpu_custom_call.1} parent=5 // pred_check
        _
      $region46: #{tpu_custom_call.1} parent=5 // pred_check_branch
        %245 = sbr.rel (%p242) target = $region48
      $region47: #{tpu_custom_call.1} parent=5 // pred_region
        %s246 = ssub.s32 %s16, 1
        %s247 = smul.u32 32, %s21
        %p248 = scmp.lt.s32.totalorder %s247, 63
        %s249 = scalar_select %p248, %s247, 63
        %s250 = smul.addr %s249, 8
        %s251 = scalar_lea.vmem %s0, %s250
        %p252 = pneg %p42
        %p253 = pneg %p39
        %p254 = pneg %p63
        %p255 = pneg %p60
        %p256 = pneg %p84
        %p257 = pneg %p81
        %p258 = pneg %p105
        %p259 = pneg %p102
        %p260 = pneg %p126
        %p261 = pneg %p123
        %p262 = pneg %p147
        %p263 = pneg %p144
        %p264 = pneg %p168
        %p265 = pneg %p165
        %p266 = pneg %p194
        %p267 = pneg %p191
        %s268 = sand.u32 %s181, 1
        %s269 = scalar_lea.sflag [#allocation3], %s268
        %s270 = sand.u32 %s181, 1
        %s271 = smul.addr %s270, 256
        %s272 = scalar_lea.vmem [#allocation2], %s271
        %s273 = smul.u32 32, %s21
        %p274 = scmp.lt.s32.totalorder %s273, 63
        %s275 = scalar_select %p274, %s273, 63
        %s276 = smul.addr %s275, 8
        %s277 = scalar_lea.vmem %s0, %s276
        %s278 = smul.u32 32, %s21
        %s279 = smul.u32 32, %s21
        %v281 = vld [vmem:[%s277] sm:$0xff]
        %v282 = vld [vmem:[%s277 + $0x8] sm:$0xff]
        %v283 = vld [vmem:[%s277 + $0x10] sm:$0xff]
        %v284 = vld [vmem:[%s277 + $0x18] sm:$0xff]
        %v285 = vld [vmem:[%s277 + $0x20] sm:$0xff]
        %v286 = vld [vmem:[%s277 + $0x28] sm:$0xff]
        %v287 = vld [vmem:[%s277 + $0x30] sm:$0xff]
        %v288 = vld [vmem:[%s277 + $0x38] sm:$0xff]
        %v289 = vld [vmem:[%s277 + $0x40] sm:$0xff]
        %v290 = vld [vmem:[%s277 + $0x48] sm:$0xff]
        %v291 = vld [vmem:[%s277 + $0x50] sm:$0xff]
        %v292 = vld [vmem:[%s277 + $0x58] sm:$0xff]
        %v293 = vld [vmem:[%s277 + $0x60] sm:$0xff]
        %v294 = vld [vmem:[%s277 + $0x68] sm:$0xff]
        %v295 = vld [vmem:[%s277 + $0x70] sm:$0xff]
        %v296 = vld [vmem:[%s277 + $0x78] sm:$0xff]
        %v297 = vld [vmem:[%s277 + $0x80] sm:$0xff]
        %v298 = vld [vmem:[%s277 + $0x88] sm:$0xff]
        %v299 = vld [vmem:[%s277 + $0x90] sm:$0xff]
        %v300 = vld [vmem:[%s277 + $0x98] sm:$0xff]
        %v301 = vld [vmem:[%s277 + $0xa0] sm:$0xff]
        %v302 = vld [vmem:[%s277 + $0xa8] sm:$0xff]
        %v303 = vld [vmem:[%s277 + $0xb0] sm:$0xff]
        %v304 = vld [vmem:[%s277 + $0xb8] sm:$0xff]
        %v305 = vld [vmem:[%s277 + $0xc0] sm:$0xff]
        %v306 = vld [vmem:[%s277 + $0xc8] sm:$0xff]
        %v307 = vld [vmem:[%s277 + $0xd0] sm:$0xff]
        %v308 = vld [vmem:[%s277 + $0xd8] sm:$0xff]
        %v309 = vld [vmem:[%s277 + $0xe0] sm:$0xff]
        %v310 = vld [vmem:[%s277 + $0xe8] sm:$0xff]
        %v311 = vld [vmem:[%s277 + $0xf0] sm:$0xff]
        %v312 = vld [vmem:[%s277 + $0xf8] sm:$0xff]
        %v313 = vpack.c.bf16 %v282, %v281
        %v314 = vpack.c.bf16 %v284, %v283
        %v315 = vpack.c.bf16 %v286, %v285
        %v316 = vpack.c.bf16 %v288, %v287
        %v317 = vpack.c.bf16 %v290, %v289
        %v318 = vpack.c.bf16 %v292, %v291
        %v319 = vpack.c.bf16 %v294, %v293
        %v320 = vpack.c.bf16 %v296, %v295
        %v321 = vpack.c.bf16 %v298, %v297
        %v322 = vpack.c.bf16 %v300, %v299
        %v323 = vpack.c.bf16 %v302, %v301
        %v324 = vpack.c.bf16 %v304, %v303
        %v325 = vpack.c.bf16 %v306, %v305
        %v326 = vpack.c.bf16 %v308, %v307
        %v327 = vpack.c.bf16 %v310, %v309
        %v328 = vpack.c.bf16 %v312, %v311
        %v329 = vld [vmem:[%s1] sm:$0xf]
        %v330 = vld [vmem:[%s1 + $0x4] sm:$0xf]
        %v331 = vld [vmem:[%s2] sm:$0x1]
        %v333 = vlaneseq
        %v334 = vshrl.u32 %v333, 7
        %v335 = vsub.s32 0, %v334
        %v336 = vrot.slane %v331, %v335
        %v340 = vunpack.c.l.b16 %v329
        %v341 = vunpack.c.l.b16 %v330
        %v342 = vpack.c.b16 %v341, %v340
        %vm344 = vcmask 130048
        %v346 = vsel %vm344, %v313, 0
        %v349 = vsel %vm344, %v314, 0
        %v352 = vsel %vm344, %v315, 0
        %v355 = vsel %vm344, %v316, 0
        %v358 = vsel %vm344, %v317, 0
        %v361 = vsel %vm344, %v318, 0
        %v364 = vsel %vm344, %v319, 0
        %v367 = vsel %vm344, %v320, 0
        %v370 = vsel %vm344, %v321, 0
        %v373 = vsel %vm344, %v322, 0
        %v376 = vsel %vm344, %v323, 0
        %v379 = vsel %vm344, %v324, 0
        %v382 = vsel %vm344, %v325, 0
        %v385 = vsel %vm344, %v326, 0
        %v388 = vsel %vm344, %v327, 0
        %v391 = vsel %vm344, %v328, 0
        %393 = vmatprep.subr.bf16.mxu0 0
        %394 = vmatpush1.bf16.msra.mxu0 0
        %395 = vmatprep.subr.bf16.mxu0 0
        %396 = vmatpush1.bf16.msra.mxu0 0
        %397 = vmatprep.subr.bf16.mxu0 0
        %398 = vmatpush1.bf16.msra.mxu0 0
        %399 = vmatprep.subr.bf16.mxu0 0
        %400 = vmatpush1.bf16.msra.mxu0 0
        %401 = vmatprep.subr.bf16.mxu0 0
        %402 = vmatpush1.bf16.msra.mxu0 0
        %403 = vmatprep.subr.bf16.mxu0 0
        %404 = vmatpush1.bf16.msra.mxu0 0
        %405 = vmatprep.subr.bf16.mxu0 0
        %406 = vmatpush1.bf16.msra.mxu0 0
        %407 = vmatprep.subr.bf16.mxu0 0
        %408 = vmatpush1.bf16.msra.mxu0 %v342
        %409 = vmatprep.subr.bf16.mxu0 0
        %410 = vmatpush2.bf16.msra.mxu0 0
        %411 = vmatprep.subr.bf16.mxu0 0
        %412 = vmatpush2.bf16.msra.mxu0 0
        %413 = vmatprep.subr.bf16.mxu0 0
        %414 = vmatpush2.bf16.msra.mxu0 0
        %415 = vmatprep.subr.bf16.mxu0 0
        %416 = vmatpush2.bf16.msra.mxu0 0
        %417 = vmatprep.subr.bf16.mxu0 0
        %418 = vmatpush2.bf16.msra.mxu0 0
        %419 = vmatprep.subr.bf16.mxu0 0
        %420 = vmatpush2.bf16.msra.mxu0 0
        %421 = vmatprep.subr.bf16.mxu0 0
        %422 = vmatpush2.bf16.msra.mxu0 0
        %423 = vmatprep.subr.bf16.mxu0 0
        %424 = vmatpush2.bf16.msra.mxu0 0
        %425 = vmatprep.mubr.bf16.mxu0 0
        %426 = vmatmul.mubr.bf16.gmra.mxu0 %v346
        %v427 = vpop.f32.mrf.mxu0
        %v428 = vadd.f32 %v336, %v427
        %v429 = vpop.f32.mrf.mxu0
        %v430 = vpop.f32.mrf.mxu0
        %v431 = vadd.f32 %v336, %v430
        %v432 = vpop.f32.mrf.mxu0
        %433 = vmatprep.mubr.bf16.mxu0 0
        %434 = vmatmul.mubr.bf16.gmra.mxu0 %v349
        %v435 = vpop.f32.mrf.mxu0
        %v436 = vadd.f32 %v336, %v435
        %v437 = vpop.f32.mrf.mxu0
        %v438 = vpop.f32.mrf.mxu0
        %v439 = vadd.f32 %v336, %v438
        %v440 = vpop.f32.mrf.mxu0
        %441 = vmatprep.mubr.bf16.mxu0 0
        %442 = vmatmul.mubr.bf16.gmra.mxu0 %v352
        %v443 = vpop.f32.mrf.mxu0
        %v444 = vadd.f32 %v336, %v443
        %v445 = vpop.f32.mrf.mxu0
        %v446 = vpop.f32.mrf.mxu0
        %v447 = vadd.f32 %v336, %v446
        %v448 = vpop.f32.mrf.mxu0
        %449 = vmatprep.mubr.bf16.mxu0 0
        %450 = vmatmul.mubr.bf16.gmra.mxu0 %v355
        %v451 = vpop.f32.mrf.mxu0
        %v452 = vadd.f32 %v336, %v451
        %v453 = vpop.f32.mrf.mxu0
        %v454 = vpop.f32.mrf.mxu0
        %v455 = vadd.f32 %v336, %v454
        %v456 = vpop.f32.mrf.mxu0
        %457 = vmatprep.mubr.bf16.mxu0 0
        %458 = vmatmul.mubr.bf16.gmra.mxu0 %v358
        %v459 = vpop.f32.mrf.mxu0
        %v460 = vadd.f32 %v336, %v459
        %v461 = vpop.f32.mrf.mxu0
        %v462 = vpop.f32.mrf.mxu0
        %v463 = vadd.f32 %v336, %v462
        %v464 = vpop.f32.mrf.mxu0
        %465 = vmatprep.mubr.bf16.mxu0 0
        %466 = vmatmul.mubr.bf16.gmra.mxu0 %v361
        %v467 = vpop.f32.mrf.mxu0
        %v468 = vadd.f32 %v336, %v467
        %v469 = vpop.f32.mrf.mxu0
        %v470 = vpop.f32.mrf.mxu0
        %v471 = vadd.f32 %v336, %v470
        %v472 = vpop.f32.mrf.mxu0
        %473 = vmatprep.mubr.bf16.mxu0 0
        %474 = vmatmul.mubr.bf16.gmra.mxu0 %v364
        %v475 = vpop.f32.mrf.mxu0
        %v476 = vadd.f32 %v336, %v475
        %v477 = vpop.f32.mrf.mxu0
        %v478 = vpop.f32.mrf.mxu0
        %v479 = vadd.f32 %v336, %v478
        %v480 = vpop.f32.mrf.mxu0
        %481 = vmatprep.mubr.bf16.mxu0 0
        %482 = vmatmul.mubr.bf16.gmra.mxu0 %v367
        %v483 = vpop.f32.mrf.mxu0
        %v484 = vadd.f32 %v336, %v483
        %v485 = vpop.f32.mrf.mxu0
        %v486 = vpop.f32.mrf.mxu0
        %v487 = vadd.f32 %v336, %v486
        %v488 = vpop.f32.mrf.mxu0
        %489 = vmatprep.mubr.bf16.mxu0 0
        %490 = vmatmul.mubr.bf16.gmra.mxu0 %v370
        %v491 = vpop.f32.mrf.mxu0
        %v492 = vadd.f32 %v336, %v491
        %v493 = vpop.f32.mrf.mxu0
        %v494 = vpop.f32.mrf.mxu0
        %v495 = vadd.f32 %v336, %v494
        %v496 = vpop.f32.mrf.mxu0
        %497 = vmatprep.mubr.bf16.mxu0 0
        %498 = vmatmul.mubr.bf16.gmra.mxu0 %v373
        %v499 = vpop.f32.mrf.mxu0
        %v500 = vadd.f32 %v336, %v499
        %v501 = vpop.f32.mrf.mxu0
        %v502 = vpop.f32.mrf.mxu0
        %v503 = vadd.f32 %v336, %v502
        %v504 = vpop.f32.mrf.mxu0
        %505 = vmatprep.mubr.bf16.mxu0 0
        %506 = vmatmul.mubr.bf16.gmra.mxu0 %v376
        %v507 = vpop.f32.mrf.mxu0
        %v508 = vadd.f32 %v336, %v507
        %v509 = vpop.f32.mrf.mxu0
        %v510 = vpop.f32.mrf.mxu0
        %v511 = vadd.f32 %v336, %v510
        %v512 = vpop.f32.mrf.mxu0
        %513 = vmatprep.mubr.bf16.mxu0 0
        %514 = vmatmul.mubr.bf16.gmra.mxu0 %v379
        %v515 = vpop.f32.mrf.mxu0
        %v516 = vadd.f32 %v336, %v515
        %v517 = vpop.f32.mrf.mxu0
        %v518 = vpop.f32.mrf.mxu0
        %v519 = vadd.f32 %v336, %v518
        %v520 = vpop.f32.mrf.mxu0
        %521 = vmatprep.mubr.bf16.mxu0 0
        %522 = vmatmul.mubr.bf16.gmra.mxu0 %v382
        %v523 = vpop.f32.mrf.mxu0
        %v524 = vadd.f32 %v336, %v523
        %v525 = vpop.f32.mrf.mxu0
        %v526 = vpop.f32.mrf.mxu0
        %v527 = vadd.f32 %v336, %v526
        %v528 = vpop.f32.mrf.mxu0
        %529 = vmatprep.mubr.bf16.mxu0 0
        %530 = vmatmul.mubr.bf16.gmra.mxu0 %v385
        %v531 = vpop.f32.mrf.mxu0
        %v532 = vadd.f32 %v336, %v531
        %v533 = vpop.f32.mrf.mxu0
        %v534 = vpop.f32.mrf.mxu0
        %v535 = vadd.f32 %v336, %v534
        %v536 = vpop.f32.mrf.mxu0
        %537 = vmatprep.mubr.bf16.mxu0 0
        %538 = vmatmul.mubr.bf16.gmra.mxu0 %v388
        %v539 = vpop.f32.mrf.mxu0
        %v540 = vadd.f32 %v336, %v539
        %v541 = vpop.f32.mrf.mxu0
        %v542 = vpop.f32.mrf.mxu0
        %v543 = vadd.f32 %v336, %v542
        %v544 = vpop.f32.mrf.mxu0
        %545 = vmatprep.mubr.bf16.mxu0 0
        %546 = vmatmul.mubr.bf16.gmra.mxu0 %v391
        %v547 = vpop.f32.mrf.mxu0
        %v548 = vadd.f32 %v336, %v547
        %v549 = vpop.f32.mrf.mxu0
        %v550 = vpop.f32.mrf.mxu0
        %v551 = vadd.f32 %v336, %v550
        %v552 = vpop.f32.mrf.mxu0
        %553 = vdwg.mxu0
        %v554 = vmax.f32 %v428, 0.0
        %v555 = vmax.f32 %v431, 0.0
        %v556 = vmax.f32 %v436, 0.0
        %v557 = vmax.f32 %v439, 0.0
        %v558 = vmax.f32 %v444, 0.0
        %v559 = vmax.f32 %v447, 0.0
        %v560 = vmax.f32 %v452, 0.0
        %v561 = vmax.f32 %v455, 0.0
        %v562 = vmax.f32 %v460, 0.0
        %v563 = vmax.f32 %v463, 0.0
        %v564 = vmax.f32 %v468, 0.0
        %v565 = vmax.f32 %v471, 0.0
        %v566 = vmax.f32 %v476, 0.0
        %v567 = vmax.f32 %v479, 0.0
        %v568 = vmax.f32 %v484, 0.0
        %v569 = vmax.f32 %v487, 0.0
        %v570 = vmax.f32 %v492, 0.0
        %v571 = vmax.f32 %v495, 0.0
        %v572 = vmax.f32 %v500, 0.0
        %v573 = vmax.f32 %v503, 0.0
        %v574 = vmax.f32 %v508, 0.0
        %v575 = vmax.f32 %v511, 0.0
        %v576 = vmax.f32 %v516, 0.0
        %v577 = vmax.f32 %v519, 0.0
        %v578 = vmax.f32 %v524, 0.0
        %v579 = vmax.f32 %v527, 0.0
        %v580 = vmax.f32 %v532, 0.0
        %v581 = vmax.f32 %v535, 0.0
        %v582 = vmax.f32 %v540, 0.0
        %v583 = vmax.f32 %v543, 0.0
        %v584 = vmax.f32 %v548, 0.0
        %v585 = vmax.f32 %v551, 0.0
        %v586 = vpack.c.bf16 %v555, %v554
        %v587 = vpack.c.bf16 %v557, %v556
        %v588 = vpack.c.bf16 %v559, %v558
        %v589 = vpack.c.bf16 %v561, %v560
        %v590 = vpack.c.bf16 %v563, %v562
        %v591 = vpack.c.bf16 %v565, %v564
        %v592 = vpack.c.bf16 %v567, %v566
        %v593 = vpack.c.bf16 %v569, %v568
        %v594 = vpack.c.bf16 %v571, %v570
        %v595 = vpack.c.bf16 %v573, %v572
        %v596 = vpack.c.bf16 %v575, %v574
        %v597 = vpack.c.bf16 %v577, %v576
        %v598 = vpack.c.bf16 %v579, %v578
        %v599 = vpack.c.bf16 %v581, %v580
        %v600 = vpack.c.bf16 %v583, %v582
        %v601 = vpack.c.bf16 %v585, %v584
        %v602 = vld [vmem:[%s3] sm:$0xf]
        %v603 = vld [vmem:[%s3 + $0x4] sm:$0xf]
        %v604 = vld [vmem:[%s3 + $0x8] sm:$0xf]
        %v605 = vld [vmem:[%s3 + $0xc] sm:$0xf]
        %v606 = vld [vmem:[%s4] sm:$0x1]
        %v608 = vlaneseq
        %v609 = vshrl.u32 %v608, 7
        %v610 = vsub.s32 0, %v609
        %v611 = vrot.slane %v606, %v610
        %v617 = vunpack.c.l.b16 %v602
        %v618 = vunpack.c.l.b16 %v603
        %v619 = vunpack.c.l.b16 %v604
        %v620 = vunpack.c.l.b16 %v605
        %v621 = vpack.c.b16 %v618, %v617
        %v622 = vpack.c.b16 %v620, %v619
        %vm625 = vcmask 261120
        %v627 = vsel %vm625, %v586, 0
        %v630 = vsel %vm625, %v587, 0
        %v633 = vsel %vm625, %v588, 0
        %v636 = vsel %vm625, %v589, 0
        %v639 = vsel %vm625, %v590, 0
        %v642 = vsel %vm625, %v591, 0
        %v645 = vsel %vm625, %v592, 0
        %v648 = vsel %vm625, %v593, 0
        %v651 = vsel %vm625, %v594, 0
        %v654 = vsel %vm625, %v595, 0
        %v657 = vsel %vm625, %v596, 0
        %v660 = vsel %vm625, %v597, 0
        %v663 = vsel %vm625, %v598, 0
        %v666 = vsel %vm625, %v599, 0
        %v669 = vsel %vm625, %v600, 0
        %v672 = vsel %vm625, %v601, 0
        %674 = vmatprep.subr.bf16.mxu0 0
        %675 = vmatpush1.bf16.msra.mxu0 0
        %676 = vmatprep.subr.bf16.mxu0 0
        %677 = vmatpush1.bf16.msra.mxu0 0
        %678 = vmatprep.subr.bf16.mxu0 0
        %679 = vmatpush1.bf16.msra.mxu0 0
        %680 = vmatprep.subr.bf16.mxu0 0
        %681 = vmatpush1.bf16.msra.mxu0 0
        %682 = vmatprep.subr.bf16.mxu0 0
        %683 = vmatpush1.bf16.msra.mxu0 0
        %684 = vmatprep.subr.bf16.mxu0 0
        %685 = vmatpush1.bf16.msra.mxu0 0
        %686 = vmatprep.subr.bf16.mxu0 0
        %687 = vmatpush1.bf16.msra.mxu0 %v622
        %688 = vmatprep.subr.bf16.mxu0 0
        %689 = vmatpush1.bf16.msra.mxu0 %v621
        %690 = vmatprep.subr.bf16.mxu0 0
        %691 = vmatpush2.bf16.msra.mxu0 0
        %692 = vmatprep.subr.bf16.mxu0 0
        %693 = vmatpush2.bf16.msra.mxu0 0
        %694 = vmatprep.subr.bf16.mxu0 0
        %695 = vmatpush2.bf16.msra.mxu0 0
        %696 = vmatprep.subr.bf16.mxu0 0
        %697 = vmatpush2.bf16.msra.mxu0 0
        %698 = vmatprep.subr.bf16.mxu0 0
        %699 = vmatpush2.bf16.msra.mxu0 0
        %700 = vmatprep.subr.bf16.mxu0 0
        %701 = vmatpush2.bf16.msra.mxu0 0
        %702 = vmatprep.subr.bf16.mxu0 0
        %703 = vmatpush2.bf16.msra.mxu0 0
        %704 = vmatprep.subr.bf16.mxu0 0
        %705 = vmatpush2.bf16.msra.mxu0 0
        %706 = vmatprep.mubr.bf16.mxu0 0
        %707 = vmatmul.mubr.bf16.gmra.mxu0 %v627
        %v708 = vpop.f32.mrf.mxu0
        %v709 = vadd.f32 %v611, %v708
        %v710 = vpop.f32.mrf.mxu0
        %v711 = vpop.f32.mrf.mxu0
        %v712 = vadd.f32 %v611, %v711
        %v713 = vpop.f32.mrf.mxu0
        %714 = vmatprep.mubr.bf16.mxu0 0
        %715 = vmatmul.mubr.bf16.gmra.mxu0 %v630
        %v716 = vpop.f32.mrf.mxu0
        %v717 = vadd.f32 %v611, %v716
        %v718 = vpop.f32.mrf.mxu0
        %v719 = vpop.f32.mrf.mxu0
        %v720 = vadd.f32 %v611, %v719
        %v721 = vpop.f32.mrf.mxu0
        %722 = vmatprep.mubr.bf16.mxu0 0
        %723 = vmatmul.mubr.bf16.gmra.mxu0 %v633
        %v724 = vpop.f32.mrf.mxu0
        %v725 = vadd.f32 %v611, %v724
        %v726 = vpop.f32.mrf.mxu0
        %v727 = vpop.f32.mrf.mxu0
        %v728 = vadd.f32 %v611, %v727
        %v729 = vpop.f32.mrf.mxu0
        %730 = vmatprep.mubr.bf16.mxu0 0
        %731 = vmatmul.mubr.bf16.gmra.mxu0 %v636
        %v732 = vpop.f32.mrf.mxu0
        %v733 = vadd.f32 %v611, %v732
        %v734 = vpop.f32.mrf.mxu0
        %v735 = vpop.f32.mrf.mxu0
        %v736 = vadd.f32 %v611, %v735
        %v737 = vpop.f32.mrf.mxu0
        %738 = vmatprep.mubr.bf16.mxu0 0
        %739 = vmatmul.mubr.bf16.gmra.mxu0 %v639
        %v740 = vpop.f32.mrf.mxu0
        %v741 = vadd.f32 %v611, %v740
        %v742 = vpop.f32.mrf.mxu0
        %v743 = vpop.f32.mrf.mxu0
        %v744 = vadd.f32 %v611, %v743
        %v745 = vpop.f32.mrf.mxu0
        %746 = vmatprep.mubr.bf16.mxu0 0
        %747 = vmatmul.mubr.bf16.gmra.mxu0 %v642
        %v748 = vpop.f32.mrf.mxu0
        %v749 = vadd.f32 %v611, %v748
        %v750 = vpop.f32.mrf.mxu0
        %v751 = vpop.f32.mrf.mxu0
        %v752 = vadd.f32 %v611, %v751
        %v753 = vpop.f32.mrf.mxu0
        %754 = vmatprep.mubr.bf16.mxu0 0
        %755 = vmatmul.mubr.bf16.gmra.mxu0 %v645
        %v756 = vpop.f32.mrf.mxu0
        %v757 = vadd.f32 %v611, %v756
        %v758 = vpop.f32.mrf.mxu0
        %v759 = vpop.f32.mrf.mxu0
        %v760 = vadd.f32 %v611, %v759
        %v761 = vpop.f32.mrf.mxu0
        %762 = vmatprep.mubr.bf16.mxu0 0
        %763 = vmatmul.mubr.bf16.gmra.mxu0 %v648
        %v764 = vpop.f32.mrf.mxu0
        %v765 = vadd.f32 %v611, %v764
        %v766 = vpop.f32.mrf.mxu0
        %v767 = vpop.f32.mrf.mxu0
        %v768 = vadd.f32 %v611, %v767
        %v769 = vpop.f32.mrf.mxu0
        %770 = vmatprep.mubr.bf16.mxu0 0
        %771 = vmatmul.mubr.bf16.gmra.mxu0 %v651
        %v772 = vpop.f32.mrf.mxu0
        %v773 = vadd.f32 %v611, %v772
        %v774 = vpop.f32.mrf.mxu0
        %v775 = vpop.f32.mrf.mxu0
        %v776 = vadd.f32 %v611, %v775
        %v777 = vpop.f32.mrf.mxu0
        %778 = vmatprep.mubr.bf16.mxu0 0
        %779 = vmatmul.mubr.bf16.gmra.mxu0 %v654
        %v780 = vpop.f32.mrf.mxu0
        %v781 = vadd.f32 %v611, %v780
        %v782 = vpop.f32.mrf.mxu0
        %v783 = vpop.f32.mrf.mxu0
        %v784 = vadd.f32 %v611, %v783
        %v785 = vpop.f32.mrf.mxu0
        %786 = vmatprep.mubr.bf16.mxu0 0
        %787 = vmatmul.mubr.bf16.gmra.mxu0 %v657
        %v788 = vpop.f32.mrf.mxu0
        %v789 = vadd.f32 %v611, %v788
        %v790 = vpop.f32.mrf.mxu0
        %v791 = vpop.f32.mrf.mxu0
        %v792 = vadd.f32 %v611, %v791
        %v793 = vpop.f32.mrf.mxu0
        %794 = vmatprep.mubr.bf16.mxu0 0
        %795 = vmatmul.mubr.bf16.gmra.mxu0 %v660
        %v796 = vpop.f32.mrf.mxu0
        %v797 = vadd.f32 %v611, %v796
        %v798 = vpop.f32.mrf.mxu0
        %v799 = vpop.f32.mrf.mxu0
        %v800 = vadd.f32 %v611, %v799
        %v801 = vpop.f32.mrf.mxu0
        %802 = vmatprep.mubr.bf16.mxu0 0
        %803 = vmatmul.mubr.bf16.gmra.mxu0 %v663
        %v804 = vpop.f32.mrf.mxu0
        %v805 = vadd.f32 %v611, %v804
        %v806 = vpop.f32.mrf.mxu0
        %v807 = vpop.f32.mrf.mxu0
        %v808 = vadd.f32 %v611, %v807
        %v809 = vpop.f32.mrf.mxu0
        %810 = vmatprep.mubr.bf16.mxu0 0
        %811 = vmatmul.mubr.bf16.gmra.mxu0 %v666
        %v812 = vpop.f32.mrf.mxu0
        %v813 = vadd.f32 %v611, %v812
        %v814 = vpop.f32.mrf.mxu0
        %v815 = vpop.f32.mrf.mxu0
        %v816 = vadd.f32 %v611, %v815
        %v817 = vpop.f32.mrf.mxu0
        %818 = vmatprep.mubr.bf16.mxu0 0
        %819 = vmatmul.mubr.bf16.gmra.mxu0 %v669
        %v820 = vpop.f32.mrf.mxu0
        %v821 = vadd.f32 %v611, %v820
        %v822 = vpop.f32.mrf.mxu0
        %v823 = vpop.f32.mrf.mxu0
        %v824 = vadd.f32 %v611, %v823
        %v825 = vpop.f32.mrf.mxu0
        %826 = vmatprep.mubr.bf16.mxu0 0
        %827 = vmatmul.mubr.bf16.gmra.mxu0 %v672
        %v828 = vpop.f32.mrf.mxu0
        %v829 = vadd.f32 %v611, %v828
        %v830 = vpop.f32.mrf.mxu0
        %v831 = vpop.f32.mrf.mxu0
        %v832 = vadd.f32 %v611, %v831
        %v833 = vpop.f32.mrf.mxu0
        %834 = vdwg.mxu0
        %v835 = vmax.f32 %v709, 0.0
        %v836 = vmax.f32 %v712, 0.0
        %v837 = vmax.f32 %v717, 0.0
        %v838 = vmax.f32 %v720, 0.0
        %v839 = vmax.f32 %v725, 0.0
        %v840 = vmax.f32 %v728, 0.0
        %v841 = vmax.f32 %v733, 0.0
        %v842 = vmax.f32 %v736, 0.0
        %v843 = vmax.f32 %v741, 0.0
        %v844 = vmax.f32 %v744, 0.0
        %v845 = vmax.f32 %v749, 0.0
        %v846 = vmax.f32 %v752, 0.0
        %v847 = vmax.f32 %v757, 0.0
        %v848 = vmax.f32 %v760, 0.0
        %v849 = vmax.f32 %v765, 0.0
        %v850 = vmax.f32 %v768, 0.0
        %v851 = vmax.f32 %v773, 0.0
        %v852 = vmax.f32 %v776, 0.0
        %v853 = vmax.f32 %v781, 0.0
        %v854 = vmax.f32 %v784, 0.0
        %v855 = vmax.f32 %v789, 0.0
        %v856 = vmax.f32 %v792, 0.0
        %v857 = vmax.f32 %v797, 0.0
        %v858 = vmax.f32 %v800, 0.0
        %v859 = vmax.f32 %v805, 0.0
        %v860 = vmax.f32 %v808, 0.0
        %v861 = vmax.f32 %v813, 0.0
        %v862 = vmax.f32 %v816, 0.0
        %v863 = vmax.f32 %v821, 0.0
        %v864 = vmax.f32 %v824, 0.0
        %v865 = vmax.f32 %v829, 0.0
        %v866 = vmax.f32 %v832, 0.0
        %v867 = vpack.c.bf16 %v836, %v835
        %v868 = vpack.c.bf16 %v838, %v837
        %v869 = vpack.c.bf16 %v840, %v839
        %v870 = vpack.c.bf16 %v842, %v841
        %v871 = vpack.c.bf16 %v844, %v843
        %v872 = vpack.c.bf16 %v846, %v845
        %v873 = vpack.c.bf16 %v848, %v847
        %v874 = vpack.c.bf16 %v850, %v849
        %v875 = vpack.c.bf16 %v852, %v851
        %v876 = vpack.c.bf16 %v854, %v853
        %v877 = vpack.c.bf16 %v856, %v855
        %v878 = vpack.c.bf16 %v858, %v857
        %v879 = vpack.c.bf16 %v860, %v859
        %v880 = vpack.c.bf16 %v862, %v861
        %v881 = vpack.c.bf16 %v864, %v863
        %v882 = vpack.c.bf16 %v866, %v865
        %v883 = vld [vmem:[%s5] sm:$0xf]
        %v884 = vld [vmem:[%s5 + $0x4] sm:$0xf]
        %v885 = vld [vmem:[%s5 + $0x8] sm:$0xf]
        %v886 = vld [vmem:[%s5 + $0xc] sm:$0xf]
        %v887 = vld [vmem:[%s5 + $0x10] sm:$0xf]
        %v888 = vld [vmem:[%s5 + $0x14] sm:$0xf]
        %v889 = vld [vmem:[%s5 + $0x18] sm:$0xf]
        %v890 = vld [vmem:[%s5 + $0x1c] sm:$0xf]
        %v891 = vld [vmem:[%s6] sm:$0x1]
        %v893 = vlaneseq
        %v894 = vshrl.u32 %v893, 7
        %v895 = vsub.s32 0, %v894
        %v896 = vrot.slane %v891, %v895
        %v906 = vunpack.c.l.b16 %v883
        %v907 = vunpack.c.l.b16 %v884
        %v908 = vunpack.c.l.b16 %v885
        %v909 = vunpack.c.l.b16 %v886
        %v910 = vunpack.c.l.b16 %v887
        %v911 = vunpack.c.l.b16 %v888
        %v912 = vunpack.c.l.b16 %v889
        %v913 = vunpack.c.l.b16 %v890
        %v914 = vpack.c.b16 %v907, %v906
        %v915 = vpack.c.b16 %v909, %v908
        %v916 = vpack.c.b16 %v911, %v910
        %v917 = vpack.c.b16 %v913, %v912
        %vm922 = vcmask 523264
        %v924 = vsel %vm922, %v867, 0
        %v927 = vsel %vm922, %v868, 0
        %v930 = vsel %vm922, %v869, 0
        %v933 = vsel %vm922, %v870, 0
        %v936 = vsel %vm922, %v871, 0
        %v939 = vsel %vm922, %v872, 0
        %v942 = vsel %vm922, %v873, 0
        %v945 = vsel %vm922, %v874, 0
        %v948 = vsel %vm922, %v875, 0
        %v951 = vsel %vm922, %v876, 0
        %v954 = vsel %vm922, %v877, 0
        %v957 = vsel %vm922, %v878, 0
        %v960 = vsel %vm922, %v879, 0
        %v963 = vsel %vm922, %v880, 0
        %v966 = vsel %vm922, %v881, 0
        %v969 = vsel %vm922, %v882, 0
        %971 = vmatprep.subr.bf16.mxu0 0
        %972 = vmatpush1.bf16.msra.mxu0 0
        %973 = vmatprep.subr.bf16.mxu0 0
        %974 = vmatpush1.bf16.msra.mxu0 0
        %975 = vmatprep.subr.bf16.mxu0 0
        %976 = vmatpush1.bf16.msra.mxu0 0
        %977 = vmatprep.subr.bf16.mxu0 0
        %978 = vmatpush1.bf16.msra.mxu0 0
        %979 = vmatprep.subr.bf16.mxu0 0
        %980 = vmatpush1.bf16.msra.mxu0 %v917
        %981 = vmatprep.subr.bf16.mxu0 0
        %982 = vmatpush1.bf16.msra.mxu0 %v916
        %983 = vmatprep.subr.bf16.mxu0 0
        %984 = vmatpush1.bf16.msra.mxu0 %v915
        %985 = vmatprep.subr.bf16.mxu0 0
        %986 = vmatpush1.bf16.msra.mxu0 %v914
        %987 = vmatprep.subr.bf16.mxu0 0
        %988 = vmatpush2.bf16.msra.mxu0 0
        %989 = vmatprep.subr.bf16.mxu0 0
        %990 = vmatpush2.bf16.msra.mxu0 0
        %991 = vmatprep.subr.bf16.mxu0 0
        %992 = vmatpush2.bf16.msra.mxu0 0
        %993 = vmatprep.subr.bf16.mxu0 0
        %994 = vmatpush2.bf16.msra.mxu0 0
        %995 = vmatprep.subr.bf16.mxu0 0
        %996 = vmatpush2.bf16.msra.mxu0 0
        %997 = vmatprep.subr.bf16.mxu0 0
        %998 = vmatpush2.bf16.msra.mxu0 0
        %999 = vmatprep.subr.bf16.mxu0 0
        %1000 = vmatpush2.bf16.msra.mxu0 0
        %1001 = vmatprep.subr.bf16.mxu0 0
        %1002 = vmatpush2.bf16.msra.mxu0 0
        %1003 = vmatprep.mubr.bf16.mxu0 0
        %1004 = vmatmul.mubr.bf16.gmra.mxu0 %v924
        %v1005 = vpop.f32.mrf.mxu0
        %v1006 = vadd.f32 %v896, %v1005
        %v1007 = vpop.f32.mrf.mxu0
        %v1008 = vpop.f32.mrf.mxu0
        %v1009 = vadd.f32 %v896, %v1008
        %v1010 = vpop.f32.mrf.mxu0
        %1011 = vmatprep.mubr.bf16.mxu0 0
        %1012 = vmatmul.mubr.bf16.gmra.mxu0 %v927
        %v1013 = vpop.f32.mrf.mxu0
        %v1014 = vadd.f32 %v896, %v1013
        %v1015 = vpop.f32.mrf.mxu0
        %v1016 = vpop.f32.mrf.mxu0
        %v1017 = vadd.f32 %v896, %v1016
        %v1018 = vpop.f32.mrf.mxu0
        %1019 = vmatprep.mubr.bf16.mxu0 0
        %1020 = vmatmul.mubr.bf16.gmra.mxu0 %v930
        %v1021 = vpop.f32.mrf.mxu0
        %v1022 = vadd.f32 %v896, %v1021
        %v1023 = vpop.f32.mrf.mxu0
        %v1024 = vpop.f32.mrf.mxu0
        %v1025 = vadd.f32 %v896, %v1024
        %v1026 = vpop.f32.mrf.mxu0
        %1027 = vmatprep.mubr.bf16.mxu0 0
        %1028 = vmatmul.mubr.bf16.gmra.mxu0 %v933
        %v1029 = vpop.f32.mrf.mxu0
        %v1030 = vadd.f32 %v896, %v1029
        %v1031 = vpop.f32.mrf.mxu0
        %v1032 = vpop.f32.mrf.mxu0
        %v1033 = vadd.f32 %v896, %v1032
        %v1034 = vpop.f32.mrf.mxu0
        %1035 = vmatprep.mubr.bf16.mxu0 0
        %1036 = vmatmul.mubr.bf16.gmra.mxu0 %v936
        %v1037 = vpop.f32.mrf.mxu0
        %v1038 = vadd.f32 %v896, %v1037
        %v1039 = vpop.f32.mrf.mxu0
        %v1040 = vpop.f32.mrf.mxu0
        %v1041 = vadd.f32 %v896, %v1040
        %v1042 = vpop.f32.mrf.mxu0
        %1043 = vmatprep.mubr.bf16.mxu0 0
        %1044 = vmatmul.mubr.bf16.gmra.mxu0 %v939
        %v1045 = vpop.f32.mrf.mxu0
        %v1046 = vadd.f32 %v896, %v1045
        %v1047 = vpop.f32.mrf.mxu0
        %v1048 = vpop.f32.mrf.mxu0
        %v1049 = vadd.f32 %v896, %v1048
        %v1050 = vpop.f32.mrf.mxu0
        %1051 = vmatprep.mubr.bf16.mxu0 0
        %1052 = vmatmul.mubr.bf16.gmra.mxu0 %v942
        %v1053 = vpop.f32.mrf.mxu0
        %v1054 = vadd.f32 %v896, %v1053
        %v1055 = vpop.f32.mrf.mxu0
        %v1056 = vpop.f32.mrf.mxu0
        %v1057 = vadd.f32 %v896, %v1056
        %v1058 = vpop.f32.mrf.mxu0
        %1059 = vmatprep.mubr.bf16.mxu0 0
        %1060 = vmatmul.mubr.bf16.gmra.mxu0 %v945
        %v1061 = vpop.f32.mrf.mxu0
        %v1062 = vadd.f32 %v896, %v1061
        %v1063 = vpop.f32.mrf.mxu0
        %v1064 = vpop.f32.mrf.mxu0
        %v1065 = vadd.f32 %v896, %v1064
        %v1066 = vpop.f32.mrf.mxu0
        %1067 = vmatprep.mubr.bf16.mxu0 0
        %1068 = vmatmul.mubr.bf16.gmra.mxu0 %v948
        %v1069 = vpop.f32.mrf.mxu0
        %v1070 = vadd.f32 %v896, %v1069
        %v1071 = vpop.f32.mrf.mxu0
        %v1072 = vpop.f32.mrf.mxu0
        %v1073 = vadd.f32 %v896, %v1072
        %v1074 = vpop.f32.mrf.mxu0
        %1075 = vmatprep.mubr.bf16.mxu0 0
        %1076 = vmatmul.mubr.bf16.gmra.mxu0 %v951
        %v1077 = vpop.f32.mrf.mxu0
        %v1078 = vadd.f32 %v896, %v1077
        %v1079 = vpop.f32.mrf.mxu0
        %v1080 = vpop.f32.mrf.mxu0
        %v1081 = vadd.f32 %v896, %v1080
        %v1082 = vpop.f32.mrf.mxu0
        %1083 = vmatprep.mubr.bf16.mxu0 0
        %1084 = vmatmul.mubr.bf16.gmra.mxu0 %v954
        %v1085 = vpop.f32.mrf.mxu0
        %v1086 = vadd.f32 %v896, %v1085
        %v1087 = vpop.f32.mrf.mxu0
        %v1088 = vpop.f32.mrf.mxu0
        %v1089 = vadd.f32 %v896, %v1088
        %v1090 = vpop.f32.mrf.mxu0
        %1091 = vmatprep.mubr.bf16.mxu0 0
        %1092 = vmatmul.mubr.bf16.gmra.mxu0 %v957
        %v1093 = vpop.f32.mrf.mxu0
        %v1094 = vadd.f32 %v896, %v1093
        %v1095 = vpop.f32.mrf.mxu0
        %v1096 = vpop.f32.mrf.mxu0
        %v1097 = vadd.f32 %v896, %v1096
        %v1098 = vpop.f32.mrf.mxu0
        %1099 = vmatprep.mubr.bf16.mxu0 0
        %1100 = vmatmul.mubr.bf16.gmra.mxu0 %v960
        %v1101 = vpop.f32.mrf.mxu0
        %v1102 = vadd.f32 %v896, %v1101
        %v1103 = vpop.f32.mrf.mxu0
        %v1104 = vpop.f32.mrf.mxu0
        %v1105 = vadd.f32 %v896, %v1104
        %v1106 = vpop.f32.mrf.mxu0
        %1107 = vmatprep.mubr.bf16.mxu0 0
        %1108 = vmatmul.mubr.bf16.gmra.mxu0 %v963
        %v1109 = vpop.f32.mrf.mxu0
        %v1110 = vadd.f32 %v896, %v1109
        %v1111 = vpop.f32.mrf.mxu0
        %v1112 = vpop.f32.mrf.mxu0
        %v1113 = vadd.f32 %v896, %v1112
        %v1114 = vpop.f32.mrf.mxu0
        %1115 = vmatprep.mubr.bf16.mxu0 0
        %1116 = vmatmul.mubr.bf16.gmra.mxu0 %v966
        %v1117 = vpop.f32.mrf.mxu0
        %v1118 = vadd.f32 %v896, %v1117
        %v1119 = vpop.f32.mrf.mxu0
        %v1120 = vpop.f32.mrf.mxu0
        %v1121 = vadd.f32 %v896, %v1120
        %v1122 = vpop.f32.mrf.mxu0
        %1123 = vmatprep.mubr.bf16.mxu0 0
        %1124 = vmatmul.mubr.bf16.gmra.mxu0 %v969
        %v1125 = vpop.f32.mrf.mxu0
        %v1126 = vadd.f32 %v896, %v1125
        %v1127 = vpop.f32.mrf.mxu0
        %v1128 = vpop.f32.mrf.mxu0
        %v1129 = vadd.f32 %v896, %v1128
        %v1130 = vpop.f32.mrf.mxu0
        %1131 = vdwg.mxu0
        %v1132 = vxor.u32 %v1006, 2147483648
        %v1133 = vxor.u32 %v1009, 2147483648
        %v1134 = vxor.u32 %v1014, 2147483648
        %v1135 = vxor.u32 %v1017, 2147483648
        %v1136 = vxor.u32 %v1022, 2147483648
        %v1137 = vxor.u32 %v1025, 2147483648
        %v1138 = vxor.u32 %v1030, 2147483648
        %v1139 = vxor.u32 %v1033, 2147483648
        %v1140 = vxor.u32 %v1038, 2147483648
        %v1141 = vxor.u32 %v1041, 2147483648
        %v1142 = vxor.u32 %v1046, 2147483648
        %v1143 = vxor.u32 %v1049, 2147483648
        %v1144 = vxor.u32 %v1054, 2147483648
        %v1145 = vxor.u32 %v1057, 2147483648
        %v1146 = vxor.u32 %v1062, 2147483648
        %v1147 = vxor.u32 %v1065, 2147483648
        %v1148 = vxor.u32 %v1070, 2147483648
        %v1149 = vxor.u32 %v1073, 2147483648
        %v1150 = vxor.u32 %v1078, 2147483648
        %v1151 = vxor.u32 %v1081, 2147483648
        %v1152 = vxor.u32 %v1086, 2147483648
        %v1153 = vxor.u32 %v1089, 2147483648
        %v1154 = vxor.u32 %v1094, 2147483648
        %v1155 = vxor.u32 %v1097, 2147483648
        %v1156 = vxor.u32 %v1102, 2147483648
        %v1157 = vxor.u32 %v1105, 2147483648
        %v1158 = vxor.u32 %v1110, 2147483648
        %v1159 = vxor.u32 %v1113, 2147483648
        %v1160 = vxor.u32 %v1118, 2147483648
        %v1161 = vxor.u32 %v1121, 2147483648
        %v1162 = vxor.u32 %v1126, 2147483648
        %v1163 = vxor.u32 %v1129, 2147483648
        %v1164 = vmul.f32 %v1132, 1.442695
        %v1165 = vpow.pop %v1164
        %v1166 = vmul.f32 %v1133, 1.442695
        %v1167 = vpow.pop %v1166
        %v1168 = vmul.f32 %v1134, 1.442695
        %v1169 = vpow.pop %v1168
        %v1170 = vmul.f32 %v1135, 1.442695
        %v1171 = vpow.pop %v1170
        %v1172 = vmul.f32 %v1136, 1.442695
        %v1173 = vpow.pop %v1172
        %v1174 = vmul.f32 %v1137, 1.442695
        %v1175 = vpow.pop %v1174
        %v1176 = vmul.f32 %v1138, 1.442695
        %v1177 = vpow.pop %v1176
        %v1178 = vmul.f32 %v1139, 1.442695
        %v1179 = vpow.pop %v1178
        %v1180 = vmul.f32 %v1140, 1.442695
        %v1181 = vpow.pop %v1180
        %v1182 = vmul.f32 %v1141, 1.442695
        %v1183 = vpow.pop %v1182
        %v1184 = vmul.f32 %v1142, 1.442695
        %v1185 = vpow.pop %v1184
        %v1186 = vmul.f32 %v1143, 1.442695
        %v1187 = vpow.pop %v1186
        %v1188 = vmul.f32 %v1144, 1.442695
        %v1189 = vpow.pop %v1188
        %v1190 = vmul.f32 %v1145, 1.442695
        %v1191 = vpow.pop %v1190
        %v1192 = vmul.f32 %v1146, 1.442695
        %v1193 = vpow.pop %v1192
        %v1194 = vmul.f32 %v1147, 1.442695
        %v1195 = vpow.pop %v1194
        %v1196 = vmul.f32 %v1148, 1.442695
        %v1197 = vpow.pop %v1196
        %v1198 = vmul.f32 %v1149, 1.442695
        %v1199 = vpow.pop %v1198
        %v1200 = vmul.f32 %v1150, 1.442695
        %v1201 = vpow.pop %v1200
        %v1202 = vmul.f32 %v1151, 1.442695
        %v1203 = vpow.pop %v1202
        %v1204 = vmul.f32 %v1152, 1.442695
        %v1205 = vpow.pop %v1204
        %v1206 = vmul.f32 %v1153, 1.442695
        %v1207 = vpow.pop %v1206
        %v1208 = vmul.f32 %v1154, 1.442695
        %v1209 = vpow.pop %v1208
        %v1210 = vmul.f32 %v1155, 1.442695
        %v1211 = vpow.pop %v1210
        %v1212 = vmul.f32 %v1156, 1.442695
        %v1213 = vpow.pop %v1212
        %v1214 = vmul.f32 %v1157, 1.442695
        %v1215 = vpow.pop %v1214
        %v1216 = vmul.f32 %v1158, 1.442695
        %v1217 = vpow.pop %v1216
        %v1218 = vmul.f32 %v1159, 1.442695
        %v1219 = vpow.pop %v1218
        %v1220 = vmul.f32 %v1160, 1.442695
        %v1221 = vpow.pop %v1220
        %v1222 = vmul.f32 %v1161, 1.442695
        %v1223 = vpow.pop %v1222
        %v1224 = vmul.f32 %v1162, 1.442695
        %v1225 = vpow.pop %v1224
        %v1226 = vmul.f32 %v1163, 1.442695
        %v1227 = vpow.pop %v1226
        %v1228 = vadd.f32 %v1165, 1.0
        %v1229 = vadd.f32 %v1167, 1.0
        %v1230 = vadd.f32 %v1169, 1.0
        %v1231 = vadd.f32 %v1171, 1.0
        %v1232 = vadd.f32 %v1173, 1.0
        %v1233 = vadd.f32 %v1175, 1.0
        %v1234 = vadd.f32 %v1177, 1.0
        %v1235 = vadd.f32 %v1179, 1.0
        %v1236 = vadd.f32 %v1181, 1.0
        %v1237 = vadd.f32 %v1183, 1.0
        %v1238 = vadd.f32 %v1185, 1.0
        %v1239 = vadd.f32 %v1187, 1.0
        %v1240 = vadd.f32 %v1189, 1.0
        %v1241 = vadd.f32 %v1191, 1.0
        %v1242 = vadd.f32 %v1193, 1.0
        %v1243 = vadd.f32 %v1195, 1.0
        %v1244 = vadd.f32 %v1197, 1.0
        %v1245 = vadd.f32 %v1199, 1.0
        %v1246 = vadd.f32 %v1201, 1.0
        %v1247 = vadd.f32 %v1203, 1.0
        %v1248 = vadd.f32 %v1205, 1.0
        %v1249 = vadd.f32 %v1207, 1.0
        %v1250 = vadd.f32 %v1209, 1.0
        %v1251 = vadd.f32 %v1211, 1.0
        %v1252 = vadd.f32 %v1213, 1.0
        %v1253 = vadd.f32 %v1215, 1.0
        %v1254 = vadd.f32 %v1217, 1.0
        %v1255 = vadd.f32 %v1219, 1.0
        %v1256 = vadd.f32 %v1221, 1.0
        %v1257 = vadd.f32 %v1223, 1.0
        %v1258 = vadd.f32 %v1225, 1.0
        %v1259 = vadd.f32 %v1227, 1.0
        %v1260 = vrcp.pop %v1228
        %v1261 = vmul.f32 1.0, %v1260
        %v1262 = vrcp.pop %v1229
        %v1263 = vmul.f32 1.0, %v1262
        %v1264 = vrcp.pop %v1230
        %v1265 = vmul.f32 1.0, %v1264
        %v1266 = vrcp.pop %v1231
        %v1267 = vmul.f32 1.0, %v1266
        %v1268 = vrcp.pop %v1232
        %v1269 = vmul.f32 1.0, %v1268
        %v1270 = vrcp.pop %v1233
        %v1271 = vmul.f32 1.0, %v1270
        %v1272 = vrcp.pop %v1234
        %v1273 = vmul.f32 1.0, %v1272
        %v1274 = vrcp.pop %v1235
        %v1275 = vmul.f32 1.0, %v1274
        %v1276 = vrcp.pop %v1236
        %v1277 = vmul.f32 1.0, %v1276
        %v1278 = vrcp.pop %v1237
        %v1279 = vmul.f32 1.0, %v1278
        %v1280 = vrcp.pop %v1238
        %v1281 = vmul.f32 1.0, %v1280
        %v1282 = vrcp.pop %v1239
        %v1283 = vmul.f32 1.0, %v1282
        %v1284 = vrcp.pop %v1240
        %v1285 = vmul.f32 1.0, %v1284
        %v1286 = vrcp.pop %v1241
        %v1287 = vmul.f32 1.0, %v1286
        %v1288 = vrcp.pop %v1242
        %v1289 = vmul.f32 1.0, %v1288
        %v1290 = vrcp.pop %v1243
        %v1291 = vmul.f32 1.0, %v1290
        %v1292 = vrcp.pop %v1244
        %v1293 = vmul.f32 1.0, %v1292
        %v1294 = vrcp.pop %v1245
        %v1295 = vmul.f32 1.0, %v1294
        %v1296 = vrcp.pop %v1246
        %v1297 = vmul.f32 1.0, %v1296
        %v1298 = vrcp.pop %v1247
        %v1299 = vmul.f32 1.0, %v1298
        %v1300 = vrcp.pop %v1248
        %v1301 = vmul.f32 1.0, %v1300
        %v1302 = vrcp.pop %v1249
        %v1303 = vmul.f32 1.0, %v1302
        %v1304 = vrcp.pop %v1250
        %v1305 = vmul.f32 1.0, %v1304
        %v1306 = vrcp.pop %v1251
        %v1307 = vmul.f32 1.0, %v1306
        %v1308 = vrcp.pop %v1252
        %v1309 = vmul.f32 1.0, %v1308
        %v1310 = vrcp.pop %v1253
        %v1311 = vmul.f32 1.0, %v1310
        %v1312 = vrcp.pop %v1254
        %v1313 = vmul.f32 1.0, %v1312
        %v1314 = vrcp.pop %v1255
        %v1315 = vmul.f32 1.0, %v1314
        %v1316 = vrcp.pop %v1256
        %v1317 = vmul.f32 1.0, %v1316
        %v1318 = vrcp.pop %v1257
        %v1319 = vmul.f32 1.0, %v1318
        %v1320 = vrcp.pop %v1258
        %v1321 = vmul.f32 1.0, %v1320
        %v1322 = vrcp.pop %v1259
        %v1323 = vmul.f32 1.0, %v1322
        %1324 = vst [vmem:[%s272] sm:$0xff] %v1261
        %1325 = vst [vmem:[%s272 + $0x8] sm:$0xff] %v1263
        %1326 = vst [vmem:[%s272 + $0x10] sm:$0xff] %v1265
        %1327 = vst [vmem:[%s272 + $0x18] sm:$0xff] %v1267
        %1328 = vst [vmem:[%s272 + $0x20] sm:$0xff] %v1269
        %1329 = vst [vmem:[%s272 + $0x28] sm:$0xff] %v1271
        %1330 = vst [vmem:[%s272 + $0x30] sm:$0xff] %v1273
        %1331 = vst [vmem:[%s272 + $0x38] sm:$0xff] %v1275
        %1332 = vst [vmem:[%s272 + $0x40] sm:$0xff] %v1277
        %1333 = vst [vmem:[%s272 + $0x48] sm:$0xff] %v1279
        %1334 = vst [vmem:[%s272 + $0x50] sm:$0xff] %v1281
        %1335 = vst [vmem:[%s272 + $0x58] sm:$0xff] %v1283
        %1336 = vst [vmem:[%s272 + $0x60] sm:$0xff] %v1285
        %1337 = vst [vmem:[%s272 + $0x68] sm:$0xff] %v1287
        %1338 = vst [vmem:[%s272 + $0x70] sm:$0xff] %v1289
        %1339 = vst [vmem:[%s272 + $0x78] sm:$0xff] %v1291
        %1340 = vst [vmem:[%s272 + $0x80] sm:$0xff] %v1293
        %1341 = vst [vmem:[%s272 + $0x88] sm:$0xff] %v1295
        %1342 = vst [vmem:[%s272 + $0x90] sm:$0xff] %v1297
        %1343 = vst [vmem:[%s272 + $0x98] sm:$0xff] %v1299
        %1344 = vst [vmem:[%s272 + $0xa0] sm:$0xff] %v1301
        %1345 = vst [vmem:[%s272 + $0xa8] sm:$0xff] %v1303
        %1346 = vst [vmem:[%s272 + $0xb0] sm:$0xff] %v1305
        %1347 = vst [vmem:[%s272 + $0xb8] sm:$0xff] %v1307
        %1348 = vst [vmem:[%s272 + $0xc0] sm:$0xff] %v1309
        %1349 = vst [vmem:[%s272 + $0xc8] sm:$0xff] %v1311
        %1350 = vst [vmem:[%s272 + $0xd0] sm:$0xff] %v1313
        %1351 = vst [vmem:[%s272 + $0xd8] sm:$0xff] %v1315
        %1352 = vst [vmem:[%s272 + $0xe0] sm:$0xff] %v1317
        %1353 = vst [vmem:[%s272 + $0xe8] sm:$0xff] %v1319
        %1354 = vst [vmem:[%s272 + $0xf0] sm:$0xff] %v1321
        %1355 = vst [vmem:[%s272 + $0xf8] sm:$0xff] %v1323
        %s1356 = sand.u32 %s181, 1
        %s1357 = scalar_lea.sflag [#allocation3], %s1356
        %s1358 = sand.u32 %s181, 1
        %s1359 = smul.addr %s1358, 256
        %s1360 = scalar_lea.vmem [#allocation2], %s1359
        // Predicated region
        $region49: #{tpu_custom_call.1} parent=47 // pred_check
          %p1361 = pneg %p191
        $region50: #{tpu_custom_call.1} parent=47 // pred_check_branch
          %1363 = sbr.rel (%p1361) target = $region52
        $region51: #{tpu_custom_call.1} parent=47 // pred_region
          %s1364 = smul.u32 32, %s21
          %s1366 = ssub.s32 4096, 4096
          %1367 = vsyncadd %s1357, %s1366
          %s1368 = smul.addr %s1364, 128
          %s1369 = scalar_lea.hbm %s7, %s1368
          %s1370 = sshll.u32 %s1360, 4
          %s1371 = int_to_ptr.vmem [resolvable:$true] %s1370
          %1376 = dma.vmem_to_hbm [thread:$0]  %s1371, 4096, %s1369, %s1357, 128, 128, 8
        $region52: #{tpu_custom_call.1} parent=47 // pred_fallthru
          _
      $region48: #{tpu_custom_call.1} parent=5 // pred_fallthru
        _
      %p1377 = scmp.le.s32.totalorder 2, %s16
      // Predicated region
      $region53: #{tpu_custom_call.1} parent=5 // pred_check
        %p1378 = pneg %p1377
      $region54: #{tpu_custom_call.1} parent=5 // pred_check_branch
        %1380 = sbr.rel (%p1378) target = $region56
      $region55: #{tpu_custom_call.1} parent=5 // pred_region
        %s1381 = ssub.s32 %s16, 2
        // Predicated region
        $region57: #{tpu_custom_call.1} parent=55 // pred_check
          %p1382 = pneg %p197
        $region58: #{tpu_custom_call.1} parent=55 // pred_check_branch
          %1384 = sbr.rel (%p1382) target = $region60
        $region59: #{tpu_custom_call.1} parent=55 // pred_region
          %s1385 = sand.u32 %s182, 1
          %s1386 = scalar_lea.sflag [#allocation3], %s1385
          %s1387 = sand.u32 %s182, 1
          %s1388 = smul.addr %s1387, 256
          %s1389 = scalar_lea.vmem [#allocation2], %s1388
          %1390 = dma.done %s1386, 4096
        $region60: #{tpu_custom_call.1} parent=55 // pred_fallthru
          _
      $region56: #{tpu_custom_call.1} parent=5 // pred_fallthru
        _
    $region6: #{tpu_custom_call.1} parent=1 // loop_footer
      %s20 = sadd.s32 1, %s16
    $region7: #{tpu_custom_call.1} parent=1 // loop_footer_branch
      %15 = sbr.rel target = $region3
    $region8: #{tpu_custom_call.1} parent=1 // loop_exit
      _
    %1391 = vsyncpa [#allocation3], 1
    %s1392 = scalar_lea.sflag [#allocation3], 1
    %1393 = vsyncpa %s1392, 1

</llo_original>
